<compile_context>
chip_gen: v6e
topology: v6e:2x2x1
jax: 0.10.0
libtpu: 0.0.40
codegen_flags: <defaults>
</compile_context>

<pallas_src>
import numpy as np
import jax
import jax.numpy as jnp
from jax.experimental import pallas as pl
from jax.experimental.pallas import tpu as pltpu


# ----------------------------------------------------------------------------
# Parameter setup glue: build the 16x16 observable matrix M = Re(U^H Z0 U)
# for a deterministic "RandomLayers"-style trainable circuit.
# ----------------------------------------------------------------------------
def build_observable_matrix(weights: np.ndarray) -> np.ndarray:
    """weights: (circuit_layers, n_rotations) float array. Returns (16,16) float32."""
    I2 = np.eye(2, dtype=np.complex128)
    X = np.array([[0, 1], [1, 0]], dtype=np.complex128)
    Y = np.array([[0, -1j], [1j, 0]], dtype=np.complex128)
    Z = np.array([[1, 0], [0, -1]], dtype=np.complex128)
    P0 = np.array([[1, 0], [0, 0]], dtype=np.complex128)
    P1 = np.array([[0, 0], [0, 1]], dtype=np.complex128)

    def rot(axis, theta):
        pauli = (X, Y, Z)[axis]
        return np.cos(theta / 2) * I2 - 1j * np.sin(theta / 2) * pauli

    def embed1(g, wire, n=4):
        # wire 0 is the most-significant bit of the basis index (PennyLane convention)
        u = np.array([[1.0]], dtype=np.complex128)
        for w in range(n):
            u = np.kron(u, g if w == wire else I2)
        return u

    def cnot(ctrl, tgt, n=4):
        return embed1(P0, ctrl, n) + embed1(P1, ctrl, n) @ embed1(X, tgt, n)

    n_layers, n_rot = weights.shape
    U = np.eye(16, dtype=np.complex128)
    # TODO(synk): PennyLane's RandomLayers samples gate types/wires/CNOT placement from a
    # seed; here we use a fixed deterministic gate layout of the same shape (n_layers x
    # n_rotations single-qubit rotations + entangling CNOTs) instead of replaying its RNG.
    for l in range(n_layers):
        for r in range(n_rot):
            wire = (3 * l + r) % 4
            axis = (l + r) % 3
            U = embed1(rot(axis, float(weights[l, r])), wire) @ U
        for (c, t) in (((0, 1), (2, 3)) if l % 2 == 0 else ((1, 2), (3, 0))):
            U = cnot(c, t) @ U

    Z0 = embed1(Z, 0)
    M = U.conj().T @ Z0 @ U
    return np.real(M).astype(np.float32)


def build_fused_observable(M1: np.ndarray, M2: np.ndarray) -> np.ndarray:
    """Block-diagonal (32,32) observable for the fused two-circuit matmul."""
    MF = np.zeros((32, 32), np.float32)
    MF[:16, :16] = M1
    MF[16:, 16:] = M2
    return MF


# ----------------------------------------------------------------------------
# Pallas kernel: per-patch RY encoding + fused <Z0> quadratic forms.
#   y_ref  : (8, TP)  rows 0-3 = circuit1 wires, rows 4-7 = circuit2 wires
#   mf_ref : (32, 32) block-diag(M1, M2)
#   out_ref: (2, TP)  row 0 = circuit1 expvals, row 1 = circuit2 expvals
# ----------------------------------------------------------------------------
def qonv_kernel(y_ref, mf_ref, out_ref):
    y = y_ref[...]                                                   # (8, TP)
    half = 0.5 * jnp.minimum(jnp.float32(np.pi), jnp.float32(np.pi) * y)  # min(pi, pi*x)/2
    c = jnp.cos(half)                                                # (8, TP)
    s = jnp.sin(half)                                                # (8, TP)

    # Constant per-sublane bit pattern of the 4-qubit basis index (wire 0 = MSB).
    # Computed once on a (16,1) iota -> no per-patch integer work, no wide broadcasts.
    row = jax.lax.broadcasted_iota(jnp.int32, (16, 1), 0)            # (16, 1)

    def build_psi(o):
        # psi[idx, p] = prod_w (s[o+w,p] if bit_w(idx) else c[o+w,p]), via sublane-constant
        # masks; product state of the four RY rotations (real amplitudes).
        psi = None
        for w in range(4):
            bit = (row >> (3 - w)) & 1                               # (16,1) constant
            f = jnp.where(bit == 1, s[o + w:o + w + 1, :], c[o + w:o + w + 1, :])  # (16,TP)
            psi = f if psi is None else psi * f
        return psi                                                   # (16, TP)

    # Fused state for both circuits; 16-sublane pieces -> vreg-aligned concat.
    psi = jnp.concatenate([build_psi(0), build_psi(4)], axis=0)      # (32, TP)

    # Single MXU matmul against the block-diagonal observable.
    mv = jnp.dot(mf_ref[...], psi, preferred_element_type=jnp.float32)  # (32, TP)
    prod = psi * mv                                                  # (32, TP)

    # Sublane reductions -> lane-dense (1, TP) rows of the output tile.
    out_ref[0:1, :] = jnp.sum(prod[0:16, :], axis=0, keepdims=True)
    out_ref[1:2, :] = jnp.sum(prod[16:32, :], axis=0, keepdims=True)


def qonv_pallas(Yc, MF, tp):
    """Yc: (8, P_pad) f32 with P_pad % tp == 0 and tp % 128 == 0. MF: (32,32) f32."""
    P_pad = Yc.shape[1]
    assert P_pad % tp == 0 and tp % 128 == 0
    grid = (P_pad // tp,)
    return pl.pallas_call(
        qonv_kernel,
        out_shape=jax.ShapeDtypeStruct((2, P_pad), jnp.float32),
        grid=grid,
        in_specs=[
            pl.BlockSpec((8, tp), lambda i: (0, i)),     # Y tile: patches on lanes
            pl.BlockSpec((32, 32), lambda i: (0, 0)),    # fused observable (resident)
        ],
        out_specs=pl.BlockSpec((2, tp), lambda i: (0, i)),
        compiler_params=pltpu.CompilerParams(
            dimension_semantics=("parallel",),
            vmem_limit_bytes=32 * 1024 * 1024,
        ),
        cost_estimate=pl.CostEstimate(
            flops=int(2 * 32 * 32 * P_pad + 64 * P_pad),
            transcendentals=int(16 * P_pad),
            bytes_accessed=int(10 * 4 * P_pad + 32 * 32 * 4),
        ),
    )(Yc, MF)


# ----------------------------------------------------------------------------
# Glue: gather patch corners (patches on the lane axis), run kernel, scatter
# into the strided output exactly as the reference loops do.
# ----------------------------------------------------------------------------
def _round_up(v, m):
    return ((v + m - 1) // m) * m


def gather_patches(x, stride=2):
    B, C, D, H, W = x.shape
    ksz = 2
    d_out = (D - ksz) // stride + 1
    h_out = (H - ksz) // stride + 1
    w_out = (W - ksz) // stride + 1
    js = np.arange(0, d_out, stride)
    ks = np.arange(0, h_out, stride)
    ls = np.arange(0, w_out, stride)
    J = js[:, None, None]
    K = ks[None, :, None]
    L = ls[None, None, :]

    def g(dj, dk, dl):
        return x[:, :, J + dj, K + dk, L + dl]  # (B, C, nj, nk, nl)

    P = B * C * len(js) * len(ks) * len(ls)
    # y1 / y2 corner orderings exactly as in the reference forward; wires on sublanes,
    # patches on lanes (no host-side transpose needed).
    y1 = jnp.stack([g(0, 0, 0), g(1, 1, 0), g(0, 1, 1), g(1, 0, 1)], axis=0).reshape(4, P)
    y2 = jnp.stack([g(1, 1, 1), g(0, 0, 1), g(1, 0, 0), g(0, 1, 0)], axis=0).reshape(4, P)
    Yc = jnp.concatenate([y1, y2], axis=0).astype(jnp.float32)       # (8, P)

    meta = dict(B=B, C=C, d_out=d_out, h_out=h_out, w_out=w_out,
                js=js, ks=ks, ls=ls, ksz=ksz, P=P)
    return Yc, meta


def qonv_layer_last_forward(x, MF, stride=2, tile_p=4096):
    # tile_p default sized well under the 32 MiB scoped-VMEM default (fits v7x's 64 MiB
    # physical VMEM too); raise on v5e/v6e if P is huge and you want fewer grid steps.
    Yc, meta = gather_patches(x, stride)
    P = meta["P"]

    tp = min(_round_up(tile_p, 128), _round_up(P, 128))
    P_pad = _round_up(P, tp)
    if P_pad != P:
        Yc = jnp.pad(Yc, ((0, 0), (0, P_pad - P)))

    ev = qonv_pallas(Yc, MF, tp)[:, :P]                              # (2, P)

    B, C = meta["B"], meta["C"]
    nj, nk, nl = len(meta["js"]), len(meta["ks"]), len(meta["ls"])
    e = ev.reshape(2, B, C, nj, nk, nl)
    combined = jnp.transpose(e, (1, 0, 2, 3, 4, 5)).reshape(B, 2 * C, nj, nk, nl)

    out = jnp.zeros((B, 2 * C, meta["d_out"], meta["h_out"], meta["w_out"]), jnp.float32)
    ksz = meta["ksz"]
    oj = (meta["js"] // ksz)[:, None, None]
    ok = (meta["ks"] // ksz)[None, :, None]
    ol = (meta["ls"] // ksz)[None, None, :]
    # Single scatter for both circuit halves (channels [0,C) = circuit1, [C,2C) = circuit2).
    out = out.at[:, :, oj, ok, ol].set(combined)
    return out


# ----------------------------------------------------------------------------
# Pure-numpy reference for the per-patch expectation values (sanity check).
# ----------------------------------------------------------------------------
def ref_expvals(Y, M):
    """Y: (P,4) per-patch wire inputs; M: (16,16)."""
    Y = np.asarray(Y, dtype=np.float64)
    ang = np.minimum(np.pi, np.pi * Y)
    c = np.cos(ang / 2)
    s = np.sin(ang / 2)
    P = Y.shape[0]
    psi = np.ones((P, 16), dtype=np.float64)
    for idx in range(16):
        amp = np.ones(P)
        for w in range(4):
            bit = (idx >> (3 - w)) & 1
            amp = amp * (s[:, w] if bit else c[:, w])
        psi[:, idx] = amp
    return np.einsum("pi,ij,pj->p", psi, np.asarray(M, np.float64), psi)


if __name__ == "__main__":
    key = jax.random.PRNGKey(0)
    kx, kw1, kw2 = jax.random.split(key, 3)

    # Small 5D input (batch=2, channels=3, depth=4, height=6, width=6), NCDHW.
    x = jax.random.uniform(kx, (2, 3, 4, 6, 6), dtype=jnp.float32)

    # Trainable circuit weights: shape [circuit_layers=2, n_rotations=4], init U(0, 2*pi)
    # (PennyLane TorchLayer default init), deterministic via PRNGKey(0).
    w1 = np.asarray(jax.random.uniform(kw1, (2, 4), minval=0.0, maxval=2 * np.pi))
    w2 = np.asarray(jax.random.uniform(kw2, (2, 4), minval=0.0, maxval=2 * np.pi))
    M1 = build_observable_matrix(w1)
    M2 = build_observable_matrix(w2)
    MF = jnp.asarray(build_fused_observable(M1, M2))

    out = qonv_layer_last_forward(x, MF, stride=2)
    out = jax.block_until_ready(out)
    assert out.shape == (2, 2 * 3, 2, 3, 3), out.shape

    # Sanity check of the in-kernel expectation values against a numpy reference.
    Yc, meta = gather_patches(x, stride=2)
    P = meta["P"]
    tp = _round_up(P, 128)
    Yp = jnp.pad(Yc, ((0, 0), (0, tp - P)))
    ev = np.asarray(qonv_pallas(Yp, MF, tp))[:, :P]
    Y1 = np.asarray(Yc[0:4]).T
    Y2 = np.asarray(Yc[4:8]).T
    np.testing.assert_allclose(ev[0], ref_expvals(Y1, M1), atol=2e-5, rtol=2e-5)
    np.testing.assert_allclose(ev[1], ref_expvals(Y2, M2), atol=2e-5, rtol=2e-5)

    print("KERNEL_OK")
</pallas_src>

<mosaic_0001>
module attributes {stable_mosaic.version = 11 : i64} {
  func.func @qonv_kernel(%arg0: i32, %arg1: memref<8x128xf32, #tpu.memory_space<vmem>>, %arg2: memref<32x32xf32, #tpu.memory_space<vmem>>, %arg3: memref<2x128xf32, #tpu.memory_space<vmem>>) attributes {dimension_semantics = [#tpu.dimension_semantics<parallel>], iteration_bounds = array<i64: 1>, scalar_prefetch = 0 : i64, scratch_operands = 0 : i64, tpu.core_type = #tpu.core_type<tc>, window_params = [{transform_indices = @transform_0, window_bounds = array<i64: 8, 128>}, {pipeline_mode = #tpu.pipeline_mode<synchronous>, transform_indices = @transform_1, window_bounds = array<i64: 32, 32>}, {transform_indices = @transform_2, window_bounds = array<i64: 2, 128>}]} {
    %c0 = arith.constant 0 : index
    %c0_0 = arith.constant 0 : index
    %0 = vector.load %arg1[%c0, %c0_0] : memref<8x128xf32, #tpu.memory_space<vmem>>, vector<8x128xf32>
    %cst = arith.constant 3.14159274 : f32
    %1 = vector.broadcast %cst : f32 to vector<8x128xf32>
    %2 = arith.mulf %1, %0 : vector<8x128xf32>
    %cst_1 = arith.constant 3.14159274 : f32
    %3 = vector.broadcast %cst_1 : f32 to vector<8x128xf32>
    %4 = arith.minimumf %3, %2 : vector<8x128xf32>
    %cst_2 = arith.constant 5.000000e-01 : f32
    %5 = vector.broadcast %cst_2 : f32 to vector<8x128xf32>
    %6 = arith.mulf %5, %4 : vector<8x128xf32>
    %7 = math.cos %6 : vector<8x128xf32>
    %8 = math.sin %6 : vector<8x128xf32>
    %9 = tpu.iota {dimensions = array<i32: 0>} : vector<16x1xi32>
    %c3_i32 = arith.constant 3 : i32
    %10 = vector.broadcast %c3_i32 : i32 to vector<16x1xi32>
    %11 = arith.shrsi %9, %10 : vector<16x1xi32>
    %c1_i32 = arith.constant 1 : i32
    %12 = vector.broadcast %c1_i32 : i32 to vector<16x1xi32>
    %13 = arith.andi %11, %12 : vector<16x1xi32>
    %c1_i32_3 = arith.constant 1 : i32
    %14 = vector.broadcast %c1_i32_3 : i32 to vector<16x1xi32>
    %15 = arith.cmpi eq, %13, %14 : vector<16x1xi32>
    %16 = vector.extract_strided_slice %8 {offsets = [0, 0], sizes = [1, 128], strides = [1, 1]} : vector<8x128xf32> to vector<1x128xf32>
    %17 = vector.extract_strided_slice %7 {offsets = [0, 0], sizes = [1, 128], strides = [1, 1]} : vector<8x128xf32> to vector<1x128xf32>
    %18 = vector.shape_cast %15 : vector<16x1xi1> to vector<16x1xi1>
    %19 = vector.broadcast %18 : vector<16x1xi1> to vector<16x128xi1>
    %20 = vector.shape_cast %16 : vector<1x128xf32> to vector<1x128xf32>
    %21 = vector.broadcast %20 : vector<1x128xf32> to vector<16x128xf32>
    %22 = vector.shape_cast %17 : vector<1x128xf32> to vector<1x128xf32>
    %23 = vector.broadcast %22 : vector<1x128xf32> to vector<16x128xf32>
    %24 = arith.select %19, %21, %23 : vector<16x128xi1>, vector<16x128xf32>
    %c2_i32 = arith.constant 2 : i32
    %25 = vector.broadcast %c2_i32 : i32 to vector<16x1xi32>
    %26 = arith.shrsi %9, %25 : vector<16x1xi32>
    %c1_i32_4 = arith.constant 1 : i32
    %27 = vector.broadcast %c1_i32_4 : i32 to vector<16x1xi32>
    %28 = arith.andi %26, %27 : vector<16x1xi32>
    %c1_i32_5 = arith.constant 1 : i32
    %29 = vector.broadcast %c1_i32_5 : i32 to vector<16x1xi32>
    %30 = arith.cmpi eq, %28, %29 : vector<16x1xi32>
    %31 = vector.extract_strided_slice %8 {offsets = [1, 0], sizes = [1, 128], strides = [1, 1]} : vector<8x128xf32> to vector<1x128xf32>
    %32 = vector.extract_strided_slice %7 {offsets = [1, 0], sizes = [1, 128], strides = [1, 1]} : vector<8x128xf32> to vector<1x128xf32>
    %33 = vector.shape_cast %30 : vector<16x1xi1> to vector<16x1xi1>
    %34 = vector.broadcast %33 : vector<16x1xi1> to vector<16x128xi1>
    %35 = vector.shape_cast %31 : vector<1x128xf32> to vector<1x128xf32>
    %36 = vector.broadcast %35 : vector<1x128xf32> to vector<16x128xf32>
    %37 = vector.shape_cast %32 : vector<1x128xf32> to vector<1x128xf32>
    %38 = vector.broadcast %37 : vector<1x128xf32> to vector<16x128xf32>
    %39 = arith.select %34, %36, %38 : vector<16x128xi1>, vector<16x128xf32>
    %40 = arith.mulf %24, %39 : vector<16x128xf32>
    %c1_i32_6 = arith.constant 1 : i32
    %41 = vector.broadcast %c1_i32_6 : i32 to vector<16x1xi32>
    %42 = arith.shrsi %9, %41 : vector<16x1xi32>
    %c1_i32_7 = arith.constant 1 : i32
    %43 = vector.broadcast %c1_i32_7 : i32 to vector<16x1xi32>
    %44 = arith.andi %42, %43 : vector<16x1xi32>
    %c1_i32_8 = arith.constant 1 : i32
    %45 = vector.broadcast %c1_i32_8 : i32 to vector<16x1xi32>
    %46 = arith.cmpi eq, %44, %45 : vector<16x1xi32>
    %47 = vector.extract_strided_slice %8 {offsets = [2, 0], sizes = [1, 128], strides = [1, 1]} : vector<8x128xf32> to vector<1x128xf32>
    %48 = vector.extract_strided_slice %7 {offsets = [2, 0], sizes = [1, 128], strides = [1, 1]} : vector<8x128xf32> to vector<1x128xf32>
    %49 = vector.shape_cast %46 : vector<16x1xi1> to vector<16x1xi1>
    %50 = vector.broadcast %49 : vector<16x1xi1> to vector<16x128xi1>
    %51 = vector.shape_cast %47 : vector<1x128xf32> to vector<1x128xf32>
    %52 = vector.broadcast %51 : vector<1x128xf32> to vector<16x128xf32>
    %53 = vector.shape_cast %48 : vector<1x128xf32> to vector<1x128xf32>
    %54 = vector.broadcast %53 : vector<1x128xf32> to vector<16x128xf32>
    %55 = arith.select %50, %52, %54 : vector<16x128xi1>, vector<16x128xf32>
    %56 = arith.mulf %40, %55 : vector<16x128xf32>
    %c0_i32 = arith.constant 0 : i32
    %57 = vector.broadcast %c0_i32 : i32 to vector<16x1xi32>
    %58 = arith.shrsi %9, %57 : vector<16x1xi32>
    %c1_i32_9 = arith.constant 1 : i32
    %59 = vector.broadcast %c1_i32_9 : i32 to vector<16x1xi32>
    %60 = arith.andi %58, %59 : vector<16x1xi32>
    %c1_i32_10 = arith.constant 1 : i32
    %61 = vector.broadcast %c1_i32_10 : i32 to vector<16x1xi32>
    %62 = arith.cmpi eq, %60, %61 : vector<16x1xi32>
    %63 = vector.extract_strided_slice %8 {offsets = [3, 0], sizes = [1, 128], strides = [1, 1]} : vector<8x128xf32> to vector<1x128xf32>
    %64 = vector.extract_strided_slice %7 {offsets = [3, 0], sizes = [1, 128], strides = [1, 1]} : vector<8x128xf32> to vector<1x128xf32>
    %65 = vector.shape_cast %62 : vector<16x1xi1> to vector<16x1xi1>
    %66 = vector.broadcast %65 : vector<16x1xi1> to vector<16x128xi1>
    %67 = vector.shape_cast %63 : vector<1x128xf32> to vector<1x128xf32>
    %68 = vector.broadcast %67 : vector<1x128xf32> to vector<16x128xf32>
    %69 = vector.shape_cast %64 : vector<1x128xf32> to vector<1x128xf32>
    %70 = vector.broadcast %69 : vector<1x128xf32> to vector<16x128xf32>
    %71 = arith.select %66, %68, %70 : vector<16x128xi1>, vector<16x128xf32>
    %72 = arith.mulf %56, %71 : vector<16x128xf32>
    %c3_i32_11 = arith.constant 3 : i32
    %73 = vector.broadcast %c3_i32_11 : i32 to vector<16x1xi32>
    %74 = arith.shrsi %9, %73 : vector<16x1xi32>
    %c1_i32_12 = arith.constant 1 : i32
    %75 = vector.broadcast %c1_i32_12 : i32 to vector<16x1xi32>
    %76 = arith.andi %74, %75 : vector<16x1xi32>
    %c1_i32_13 = arith.constant 1 : i32
    %77 = vector.broadcast %c1_i32_13 : i32 to vector<16x1xi32>
    %78 = arith.cmpi eq, %76, %77 : vector<16x1xi32>
    %79 = vector.extract_strided_slice %8 {offsets = [4, 0], sizes = [1, 128], strides = [1, 1]} : vector<8x128xf32> to vector<1x128xf32>
    %80 = vector.extract_strided_slice %7 {offsets = [4, 0], sizes = [1, 128], strides = [1, 1]} : vector<8x128xf32> to vector<1x128xf32>
    %81 = vector.shape_cast %78 : vector<16x1xi1> to vector<16x1xi1>
    %82 = vector.broadcast %81 : vector<16x1xi1> to vector<16x128xi1>
    %83 = vector.shape_cast %79 : vector<1x128xf32> to vector<1x128xf32>
    %84 = vector.broadcast %83 : vector<1x128xf32> to vector<16x128xf32>
    %85 = vector.shape_cast %80 : vector<1x128xf32> to vector<1x128xf32>
    %86 = vector.broadcast %85 : vector<1x128xf32> to vector<16x128xf32>
    %87 = arith.select %82, %84, %86 : vector<16x128xi1>, vector<16x128xf32>
    %c2_i32_14 = arith.constant 2 : i32
    %88 = vector.broadcast %c2_i32_14 : i32 to vector<16x1xi32>
    %89 = arith.shrsi %9, %88 : vector<16x1xi32>
    %c1_i32_15 = arith.constant 1 : i32
    %90 = vector.broadcast %c1_i32_15 : i32 to vector<16x1xi32>
    %91 = arith.andi %89, %90 : vector<16x1xi32>
    %c1_i32_16 = arith.constant 1 : i32
    %92 = vector.broadcast %c1_i32_16 : i32 to vector<16x1xi32>
    %93 = arith.cmpi eq, %91, %92 : vector<16x1xi32>
    %94 = vector.extract_strided_slice %8 {offsets = [5, 0], sizes = [1, 128], strides = [1, 1]} : vector<8x128xf32> to vector<1x128xf32>
    %95 = vector.extract_strided_slice %7 {offsets = [5, 0], sizes = [1, 128], strides = [1, 1]} : vector<8x128xf32> to vector<1x128xf32>
    %96 = vector.shape_cast %93 : vector<16x1xi1> to vector<16x1xi1>
    %97 = vector.broadcast %96 : vector<16x1xi1> to vector<16x128xi1>
    %98 = vector.shape_cast %94 : vector<1x128xf32> to vector<1x128xf32>
    %99 = vector.broadcast %98 : vector<1x128xf32> to vector<16x128xf32>
    %100 = vector.shape_cast %95 : vector<1x128xf32> to vector<1x128xf32>
    %101 = vector.broadcast %100 : vector<1x128xf32> to vector<16x128xf32>
    %102 = arith.select %97, %99, %101 : vector<16x128xi1>, vector<16x128xf32>
    %103 = arith.mulf %87, %102 : vector<16x128xf32>
    %c1_i32_17 = arith.constant 1 : i32
    %104 = vector.broadcast %c1_i32_17 : i32 to vector<16x1xi32>
    %105 = arith.shrsi %9, %104 : vector<16x1xi32>
    %c1_i32_18 = arith.constant 1 : i32
    %106 = vector.broadcast %c1_i32_18 : i32 to vector<16x1xi32>
    %107 = arith.andi %105, %106 : vector<16x1xi32>
    %c1_i32_19 = arith.constant 1 : i32
    %108 = vector.broadcast %c1_i32_19 : i32 to vector<16x1xi32>
    %109 = arith.cmpi eq, %107, %108 : vector<16x1xi32>
    %110 = vector.extract_strided_slice %8 {offsets = [6, 0], sizes = [1, 128], strides = [1, 1]} : vector<8x128xf32> to vector<1x128xf32>
    %111 = vector.extract_strided_slice %7 {offsets = [6, 0], sizes = [1, 128], strides = [1, 1]} : vector<8x128xf32> to vector<1x128xf32>
    %112 = vector.shape_cast %109 : vector<16x1xi1> to vector<16x1xi1>
    %113 = vector.broadcast %112 : vector<16x1xi1> to vector<16x128xi1>
    %114 = vector.shape_cast %110 : vector<1x128xf32> to vector<1x128xf32>
    %115 = vector.broadcast %114 : vector<1x128xf32> to vector<16x128xf32>
    %116 = vector.shape_cast %111 : vector<1x128xf32> to vector<1x128xf32>
    %117 = vector.broadcast %116 : vector<1x128xf32> to vector<16x128xf32>
    %118 = arith.select %113, %115, %117 : vector<16x128xi1>, vector<16x128xf32>
    %119 = arith.mulf %103, %118 : vector<16x128xf32>
    %c0_i32_20 = arith.constant 0 : i32
    %120 = vector.broadcast %c0_i32_20 : i32 to vector<16x1xi32>
    %121 = arith.shrsi %9, %120 : vector<16x1xi32>
    %c1_i32_21 = arith.constant 1 : i32
    %122 = vector.broadcast %c1_i32_21 : i32 to vector<16x1xi32>
    %123 = arith.andi %121, %122 : vector<16x1xi32>
    %c1_i32_22 = arith.constant 1 : i32
    %124 = vector.broadcast %c1_i32_22 : i32 to vector<16x1xi32>
    %125 = arith.cmpi eq, %123, %124 : vector<16x1xi32>
    %126 = vector.extract_strided_slice %8 {offsets = [7, 0], sizes = [1, 128], strides = [1, 1]} : vector<8x128xf32> to vector<1x128xf32>
    %127 = vector.extract_strided_slice %7 {offsets = [7, 0], sizes = [1, 128], strides = [1, 1]} : vector<8x128xf32> to vector<1x128xf32>
    %128 = vector.shape_cast %125 : vector<16x1xi1> to vector<16x1xi1>
    %129 = vector.broadcast %128 : vector<16x1xi1> to vector<16x128xi1>
    %130 = vector.shape_cast %126 : vector<1x128xf32> to vector<1x128xf32>
    %131 = vector.broadcast %130 : vector<1x128xf32> to vector<16x128xf32>
    %132 = vector.shape_cast %127 : vector<1x128xf32> to vector<1x128xf32>
    %133 = vector.broadcast %132 : vector<1x128xf32> to vector<16x128xf32>
    %134 = arith.select %129, %131, %133 : vector<16x128xi1>, vector<16x128xf32>
    %135 = arith.mulf %119, %134 : vector<16x128xf32>
    %136 = tpu.concatenate %72, %135 in 0 : vector<16x128xf32>, vector<16x128xf32> -> vector<32x128xf32>
    %c0_23 = arith.constant 0 : index
    %c0_24 = arith.constant 0 : index
    %137 = vector.load %arg2[%c0_23, %c0_24] : memref<32x32xf32, #tpu.memory_space<vmem>>, vector<32x32xf32>
    %cst_25 = arith.constant dense<0.000000e+00> : vector<32x128xf32>
    %138 = tpu.matmul %137, %136, %cst_25 {dimension_numbers = #tpu.dot_dimension_numbers<[1], [0], [0], [1], [0, 0, 1, 1], [], []>} : vector<32x32xf32>, vector<32x128xf32>, vector<32x128xf32> -> vector<32x128xf32>
    %139 = arith.mulf %136, %138 : vector<32x128xf32>
    %140 = vector.extract_strided_slice %139 {offsets = [0, 0], sizes = [16, 128], strides = [1, 1]} : vector<32x128xf32> to vector<16x128xf32>
    %cst_26 = arith.constant dense<0.000000e+00> : vector<128xf32>
    %141 = vector.multi_reduction <add>, %140, %cst_26 [0] : vector<16x128xf32> to vector<128xf32>
    %142 = vector.shape_cast %141 : vector<128xf32> to vector<1x128xf32>
    %c0_27 = arith.constant 0 : index
    %c0_28 = arith.constant 0 : index
    %143 = vector.load %arg3[%c0_27, %c0_28] : memref<2x128xf32, #tpu.memory_space<vmem>>, vector<1x128xf32>
    tpu.vector_store %arg3[%c0_27, %c0_28], %142 {strides = array<i32>} : memref<2x128xf32, #tpu.memory_space<vmem>>, vector<1x128xf32>,
    %144 = vector.extract_strided_slice %139 {offsets = [16, 0], sizes = [16, 128], strides = [1, 1]} : vector<32x128xf32> to vector<16x128xf32>
    %cst_29 = arith.constant dense<0.000000e+00> : vector<128xf32>
    %145 = vector.multi_reduction <add>, %144, %cst_29 [0] : vector<16x128xf32> to vector<128xf32>
    %146 = vector.shape_cast %145 : vector<128xf32> to vector<1x128xf32>
    %c1 = arith.constant 1 : index
    %c0_30 = arith.constant 0 : index
    %147 = vector.load %arg3[%c1, %c0_30] : memref<2x128xf32, #tpu.memory_space<vmem>>, vector<1x128xf32>
    tpu.vector_store %arg3[%c1, %c0_30], %146 {strides = array<i32>} : memref<2x128xf32, #tpu.memory_space<vmem>>, vector<1x128xf32>,
    return
  }
  func.func @transform_0(%arg0: i32) -> (i32, i32) {
    %c0_i32 = arith.constant 0 : i32
    %c0_i32_0 = arith.constant 0 : i32
    return %c0_i32, %arg0 : i32, i32
  }
  func.func @transform_1(%arg0: i32) -> (i32, i32) {
    %c0_i32 = arith.constant 0 : i32
    %c0_i32_0 = arith.constant 0 : i32
    %c0_i32_1 = arith.constant 0 : i32
    return %c0_i32, %c0_i32_0 : i32, i32
  }
  func.func @transform_2(%arg0: i32) -> (i32, i32) {
    %c0_i32 = arith.constant 0 : i32
    %c0_i32_0 = arith.constant 0 : i32
    return %c0_i32, %arg0 : i32, i32
  }
}

</mosaic_0001>

<llo_original>
// kernel: tpu_custom_call.1
$region0: #{tpu_custom_call.1}
  #allocation0 [shape = 'u32[]', space=smem, size = 0x4, offset = 0x4, fixed_abs, tag = 'smem constant byte address 0x4 - core index']
  #allocation1 [shape = 'u32[144,128]{1,0:T(1,128)}', space=vmem, size = 0x12000, scoped, tag = 'internal scratch']
  %s0 = inlined_call_operand.hbm [shape: f32[8,128], index: 0, kind: input, shape index: {}]
  %s1 = inlined_call_operand.hbm [shape: f32[32,32], index: 1, kind: input, shape index: {}]
  %s2 = inlined_call_operand.hbm [shape: f32[2,128], index: 2, kind: output, shape index: {}]
  %s3 = sld [smem:[#allocation0]]
  $region26: #{tpu_custom_call.1} parent=0
    _
  %s5 = ssub.s32 1, %s3
  %s6 = scalar_select 0, %s5, %s3
  $region1: #{tpu_custom_call.1} parent=0
    #allocation2 [shape = 'u8[4096]{0}', space=vmem, size = 0x1000, scoped, tag = 'input window, operand 0, single buffered']
    #allocation3 [shape = 's32[1]{0}', space=sflag, size = 0x4, scoped, tag = 'scoped memory for tpu_custom_call.1']
    #allocation4 [shape = 's32[1]{0}', space=sflag, size = 0x4, scoped, tag = 'scoped memory for tpu_custom_call.1']
    #allocation5 [shape = 'u8[16384]{0}', space=vmem, size = 0x4000, scoped, tag = 'input window, operand 1, single buffered']
    #allocation6 [shape = 's32[1]{0}', space=sflag, size = 0x4, scoped, tag = 'scoped memory for tpu_custom_call.1']
    #allocation7 [shape = 'u8[1024]{0}', space=vmem, size = 0x400, scoped, tag = 'output window, operand 0, single buffered']
    %7 = vsyncpa [#allocation3], 0
    %8 = vsyncpa [#allocation6], 0
    %9 = vsyncpa [#allocation4], 0
    // Predicated region
    $region2: #{tpu_custom_call.1} parent=1 // pred_check
      _
    $region3: #{tpu_custom_call.1} parent=1 // pred_check_branch
      %11 = sbr.rel (0) target = $region5
    $region4: #{tpu_custom_call.1} parent=1 // pred_region
      %s13 = ssub.s32 128, 128
      %14 = vsyncadd [#allocation3], %s13
      %s16 = sshll.u32 [#allocation2], 4
      %s17 = int_to_ptr.vmem [resolvable:$true] %s16
      %19 = dma.hbm_to_vmem [thread:$0]  %s0, 128, %s17, [#allocation3]
    $region5: #{tpu_custom_call.1} parent=1 // pred_fallthru
      _
    // Predicated region
    $region6: #{tpu_custom_call.1} parent=1 // pred_check
      _
    $region7: #{tpu_custom_call.1} parent=1 // pred_check_branch
      %21 = sbr.rel (0) target = $region9
    $region8: #{tpu_custom_call.1} parent=1 // pred_region
      %s23 = ssub.s32 512, 512
      %24 = vsyncadd [#allocation6], %s23
      %s25 = sshll.u32 [#allocation5], 4
      %s26 = int_to_ptr.vmem [resolvable:$true] %s25
      %31 = dma.hbm_to_vmem [thread:$0]  %s1, 512, %s26, [#allocation6], 128, 128, 8
    $region9: #{tpu_custom_call.1} parent=1 // pred_fallthru
      _
    // Predicated region
    $region10: #{tpu_custom_call.1} parent=1 // pred_check
      _
    $region11: #{tpu_custom_call.1} parent=1 // pred_check_branch
      %33 = sbr.rel (0) target = $region13
    $region12: #{tpu_custom_call.1} parent=1 // pred_region
      %34 = dma.done [#allocation3], 128
    $region13: #{tpu_custom_call.1} parent=1 // pred_fallthru
      _
    // Predicated region
    $region14: #{tpu_custom_call.1} parent=1 // pred_check
      _
    $region15: #{tpu_custom_call.1} parent=1 // pred_check_branch
      %36 = sbr.rel (0) target = $region17
    $region16: #{tpu_custom_call.1} parent=1 // pred_region
      %37 = dma.done [#allocation6], 512
    $region17: #{tpu_custom_call.1} parent=1 // pred_fallthru
      _
    %v38 = vld [vmem:[#allocation2] sm:$0xff]
    %v39 = vmul.f32 %v38, 3.1415927
    %v40 = vmin.f32 %v39, 3.1415927
    %v41 = vmul.f32 %v40, 0.5
    %v42 = vand.u32 2147483647, %v41
    %vm43 = vcmp.le.f32.partialorder %v42, 0.7853982
    %vm44 = vcmp.lt.s32.totalorder %v41, 0
    %v45 = vand.u32 %v41, 2139095040
    %v46 = vshrl.u32 %v45, 23
    %v47 = vsub.s32 %v46, 127
    %v48 = vand.u32 2147483647, %v41
    %v49 = vand.u32 %v48, 8388607
    %v50 = vor.u32 %v49, 8388608
    %v51 = vsub.s32 0, %v50
    %v52 = vadd.s32 %v47, 1
    %vm53 = vcmp.gt.s32.totalorder %v52, 0
    %v54 = vsel %vm53, %v52, 0
    %v55 = vshrl.u32 %v54, 5
    %v56 = vand.u32 %v54, 31
    %v57 = vsub.s32 32, %v56
    %v58 = vshrl.u32 683565275, %v57
    %v59 = vshll.u32 683565275, %v56
    %v60 = vshrl.u32 2475754826, %v57
    %v61 = vor.u32 %v59, %v60
    %v62 = vshll.u32 2475754826, %v56
    %v63 = vshrl.u32 2131351028, %v57
    %v64 = vor.u32 %v62, %v63
    %v65 = vshll.u32 2131351028, %v56
    %v66 = vshrl.u32 2102212464, %v57
    %v67 = vor.u32 %v65, %v66
    %v68 = vshll.u32 2102212464, %v56
    %v69 = vshrl.u32 920167782, %v57
    %v70 = vor.u32 %v68, %v69
    %v71 = vshll.u32 920167782, %v56
    %v72 = vshrl.u32 1326507024, %v57
    %v73 = vor.u32 %v71, %v72
    %vm74 = vcmp.lt.s32.totalorder %v55, 1
    %vm75 = vcmp.lt.s32.totalorder %v55, 2
    %vm76 = vcmp.lt.s32.totalorder %v55, 3
    %vm77 = vcmp.lt.s32.totalorder %v55, 4
    %v78 = vsel %vm74, %v58, %v61
    %v79 = vsel %vm77, %v67, 2102212464
    %v80 = vsel %vm76, %v64, %v79
    %v81 = vsel %vm75, %v78, %v80
    %v82 = vsel %vm74, %v61, %v64
    %v83 = vsel %vm77, %v70, 920167782
    %v84 = vsel %vm76, %v67, %v83
    %v85 = vsel %vm75, %v82, %v84
    %v86 = vsel %vm74, %v64, %v67
    %v87 = vsel %vm77, %v73, 1326507024
    %v88 = vsel %vm76, %v70, %v87
    %v89 = vsel %vm75, %v86, %v88
    %v90 = vshll.u32 %v50, 8
    %v91 = vmul.u32.u64.compose %v90, %v89
    %v92 = vextract.low.u32 %v91
    %v93 = vextract.high.u32 %v91
    %v94 = vmul.u32.u64.compose %v90, %v85
    %v95 = vextract.low.u32 %v94
    %v96 = vextract.high.u32 %v94
    %v97 = vmul.u32 %v90, %v81
    %v98 = vadd.s32 %v93, %v95
    %vm99 = vc.u32 %v93, %v95
    %v100 = vadd.s32 %v96, 1
    %v101 = vsel %vm99, %v100, %v96
    %v102 = vadd.s32 %v97, %v101
    %v103 = vadd.s32 %v102, 536870912
    %v104 = vshrl.u32 %v103, 30
    %v105 = vshll.u32 %v104, 30
    %v106 = vsub.s32 %v102, %v105
    %vm107 = vcmp.lt.s32.totalorder %v106, 0
    %v108 = vsub.s32 0, %v106
    %v109 = vsel %vm107, %v108, %v106
    %v110 = vclz %v109
    %v111 = vsub.s32 %v110, 2
    %vm112 = vcmp.gt.s32.totalorder 0, %v111
    %v113 = vsel %vm112, 0, %v111
    %v114 = vsub.s32 32, %v113
    %v115 = vshll.u32 %v106, %v113
    %v116 = vshrl.u32 %v98, %v114
    %v117 = vor.u32 %v115, %v116
    %v118 = vsub.s32 4294967266, %v113
    %v119 = vadd.s32 %v118, 127
    %v120 = vshll.u32 %v119, 23
    %v121 = vor.u32 4788187, %v120
    %v122 = vand.u32 2147483647, %v121
    %v124 = vcvt.s32.f32 %v117
    %v125 = vmul.f32 %v124, %v122
    %v126 = vxor.u32 %v125, 2147483648
    %v127 = vsel %vm44, %v126, %v125
    %v128 = vsub.s32 4, %v104
    %v129 = vsel %vm44, %v128, %v104
    %v130 = vsel %vm43, %v41, %v127
    %v131 = vsel %vm43, 0, %v129
    %v132 = vcosq.f32.pop %v130
    %v133 = vsinq.f32.pop %v130
    %vm134 = vweird.f32 %v41
    %v135 = vand.u32 %v131, 3
    %vm136 = vcmp.lt.s32.totalorder %v135, 2
    %vm137 = vcmp.eq.s32.totalorder %v135, 0
    %v138 = vxor.u32 %v133, 2147483648
    %v139 = vsel %vm137, %v132, %v138
    %vm140 = vcmp.eq.s32.totalorder %v135, 2
    %v141 = vxor.u32 %v132, 2147483648
    %v142 = vsel %vm140, %v141, %v133
    %v143 = vsel %vm136, %v139, %v142
    %v144 = vsel %vm134, nan, %v143
    %v145 = vand.u32 2147483647, %v41
    %vm146 = vcmp.le.f32.partialorder %v145, 0.7853982
    %vm147 = vcmp.lt.s32.totalorder %v41, 0
    %v148 = vand.u32 %v41, 2139095040
    %v149 = vshrl.u32 %v148, 23
    %v150 = vsub.s32 %v149, 127
    %v151 = vand.u32 2147483647, %v41
    %v152 = vand.u32 %v151, 8388607
    %v153 = vor.u32 %v152, 8388608
    %v154 = vsub.s32 0, %v153
    %v155 = vadd.s32 %v150, 1
    %vm156 = vcmp.gt.s32.totalorder %v155, 0
    %v157 = vsel %vm156, %v155, 0
    %v158 = vshrl.u32 %v157, 5
    %v159 = vand.u32 %v157, 31
    %v160 = vsub.s32 32, %v159
    %v161 = vshrl.u32 683565275, %v160
    %v162 = vshll.u32 683565275, %v159
    %v163 = vshrl.u32 2475754826, %v160
    %v164 = vor.u32 %v162, %v163
    %v165 = vshll.u32 2475754826, %v159
    %v166 = vshrl.u32 2131351028, %v160
    %v167 = vor.u32 %v165, %v166
    %v168 = vshll.u32 2131351028, %v159
    %v169 = vshrl.u32 2102212464, %v160
    %v170 = vor.u32 %v168, %v169
    %v171 = vshll.u32 2102212464, %v159
    %v172 = vshrl.u32 920167782, %v160
    %v173 = vor.u32 %v171, %v172
    %v174 = vshll.u32 920167782, %v159
    %v175 = vshrl.u32 1326507024, %v160
    %v176 = vor.u32 %v174, %v175
    %vm177 = vcmp.lt.s32.totalorder %v158, 1
    %vm178 = vcmp.lt.s32.totalorder %v158, 2
    %vm179 = vcmp.lt.s32.totalorder %v158, 3
    %vm180 = vcmp.lt.s32.totalorder %v158, 4
    %v181 = vsel %vm177, %v161, %v164
    %v182 = vsel %vm180, %v170, 2102212464
    %v183 = vsel %vm179, %v167, %v182
    %v184 = vsel %vm178, %v181, %v183
    %v185 = vsel %vm177, %v164, %v167
    %v186 = vsel %vm180, %v173, 920167782
    %v187 = vsel %vm179, %v170, %v186
    %v188 = vsel %vm178, %v185, %v187
    %v189 = vsel %vm177, %v167, %v170
    %v190 = vsel %vm180, %v176, 1326507024
    %v191 = vsel %vm179, %v173, %v190
    %v192 = vsel %vm178, %v189, %v191
    %v193 = vshll.u32 %v153, 8
    %v194 = vmul.u32.u64.compose %v193, %v192
    %v195 = vextract.low.u32 %v194
    %v196 = vextract.high.u32 %v194
    %v197 = vmul.u32.u64.compose %v193, %v188
    %v198 = vextract.low.u32 %v197
    %v199 = vextract.high.u32 %v197
    %v200 = vmul.u32 %v193, %v184
    %v201 = vadd.s32 %v196, %v198
    %vm202 = vc.u32 %v196, %v198
    %v203 = vadd.s32 %v199, 1
    %v204 = vsel %vm202, %v203, %v199
    %v205 = vadd.s32 %v200, %v204
    %v206 = vadd.s32 %v205, 536870912
    %v207 = vshrl.u32 %v206, 30
    %v208 = vshll.u32 %v207, 30
    %v209 = vsub.s32 %v205, %v208
    %vm210 = vcmp.lt.s32.totalorder %v209, 0
    %v211 = vsub.s32 0, %v209
    %v212 = vsel %vm210, %v211, %v209
    %v213 = vclz %v212
    %v214 = vsub.s32 %v213, 2
    %vm215 = vcmp.gt.s32.totalorder 0, %v214
    %v216 = vsel %vm215, 0, %v214
    %v217 = vsub.s32 32, %v216
    %v218 = vshll.u32 %v209, %v216
    %v219 = vshrl.u32 %v201, %v217
    %v220 = vor.u32 %v218, %v219
    %v221 = vsub.s32 4294967266, %v216
    %v222 = vadd.s32 %v221, 127
    %v223 = vshll.u32 %v222, 23
    %v224 = vor.u32 4788187, %v223
    %v225 = vand.u32 2147483647, %v224
    %v227 = vcvt.s32.f32 %v220
    %v228 = vmul.f32 %v227, %v225
    %v229 = vxor.u32 %v228, 2147483648
    %v230 = vsel %vm147, %v229, %v228
    %v231 = vsub.s32 4, %v207
    %v232 = vsel %vm147, %v231, %v207
    %v233 = vsel %vm146, %v41, %v230
    %v234 = vsel %vm146, 0, %v232
    %v235 = vcosq.f32.pop %v233
    %v236 = vsinq.f32.pop %v233
    %vm237 = vweird.f32 %v41
    %v238 = vadd.s32 %v234, 3
    %v239 = vand.u32 %v238, 3
    %vm240 = vcmp.lt.s32.totalorder %v239, 2
    %vm241 = vcmp.eq.s32.totalorder %v239, 0
    %v242 = vxor.u32 %v236, 2147483648
    %v243 = vsel %vm241, %v235, %v242
    %vm244 = vcmp.eq.s32.totalorder %v239, 2
    %v245 = vxor.u32 %v235, 2147483648
    %v246 = vsel %vm244, %v245, %v236
    %v247 = vsel %vm240, %v243, %v246
    %v248 = vsel %vm237, nan, %v247
    %v249 = vlaneseq
    %v250 = vshrl.u32 %v249, 7
    %v251 = vadd.s32 %v250, 8
    %v252 = vshra.s32 %v250, 3
    %v253 = vshra.s32 %v251, 3
    %v254 = vand.u32 %v252, 1
    %v255 = vand.u32 %v253, 1
    %vm256 = vcmp.eq.s32.totalorder %v254, 1
    %vm257 = vcmp.eq.s32.totalorder %v255, 1
    %v258 = vsel %vm256, 1, 0
    %v259 = vsel %vm257, 1, 0
    %vm260 = vcmp.eq.s32.totalorder %v258, 1
    %vm261 = vcmp.eq.s32.totalorder %v259, 1
    %v262 = vlaneseq
    %v263 = vshrl.u32 %v262, 7
    %v264 = vsub.s32 0, %v263
    %v265 = vrot.slane %v248, %v264
    %v266 = vlaneseq
    %v267 = vshrl.u32 %v266, 7
    %v268 = vsub.s32 0, %v267
    %v269 = vrot.slane %v144, %v268
    %v270 = vsel %vm260, %v265, %v269
    %v271 = vsel %vm261, %v265, %v269
    %v272 = vshra.s32 %v250, 2
    %v273 = vshra.s32 %v251, 2
    %v274 = vand.u32 %v272, 1
    %v275 = vand.u32 %v273, 1
    %vm276 = vcmp.eq.s32.totalorder %v274, 1
    %vm277 = vcmp.eq.s32.totalorder %v275, 1
    %v278 = vsel %vm276, 1, 0
    %v279 = vsel %vm277, 1, 0
    %vm280 = vcmp.eq.s32.totalorder %v278, 1
    %vm281 = vcmp.eq.s32.totalorder %v279, 1
    %v282 = vlaneseq
    %v283 = vshrl.u32 %v282, 7
    %v284 = vsub.s32 1, %v283
    %v285 = vrot.slane %v248, %v284
    %v286 = vlaneseq
    %v287 = vshrl.u32 %v286, 7
    %v288 = vsub.s32 1, %v287
    %v289 = vrot.slane %v144, %v288
    %v290 = vsel %vm280, %v285, %v289
    %v291 = vsel %vm281, %v285, %v289
    %v292 = vmul.f32 %v270, %v290
    %v293 = vmul.f32 %v271, %v291
    %v294 = vshra.s32 %v250, 1
    %v295 = vshra.s32 %v251, 1
    %v296 = vand.u32 %v294, 1
    %v297 = vand.u32 %v295, 1
    %vm298 = vcmp.eq.s32.totalorder %v296, 1
    %vm299 = vcmp.eq.s32.totalorder %v297, 1
    %v300 = vsel %vm298, 1, 0
    %v301 = vsel %vm299, 1, 0
    %vm302 = vcmp.eq.s32.totalorder %v300, 1
    %vm303 = vcmp.eq.s32.totalorder %v301, 1
    %v304 = vlaneseq
    %v305 = vshrl.u32 %v304, 7
    %v306 = vsub.s32 2, %v305
    %v307 = vrot.slane %v248, %v306
    %v308 = vlaneseq
    %v309 = vshrl.u32 %v308, 7
    %v310 = vsub.s32 2, %v309
    %v311 = vrot.slane %v144, %v310
    %v312 = vsel %vm302, %v307, %v311
    %v313 = vsel %vm303, %v307, %v311
    %v314 = vmul.f32 %v292, %v312
    %v315 = vmul.f32 %v293, %v313
    %v316 = vand.u32 %v250, 1
    %v317 = vand.u32 %v251, 1
    %vm318 = vcmp.eq.s32.totalorder %v316, 1
    %vm319 = vcmp.eq.s32.totalorder %v317, 1
    %v320 = vsel %vm318, 1, 0
    %v321 = vsel %vm319, 1, 0
    %vm322 = vcmp.eq.s32.totalorder %v320, 1
    %vm323 = vcmp.eq.s32.totalorder %v321, 1
    %v324 = vlaneseq
    %v325 = vshrl.u32 %v324, 7
    %v326 = vsub.s32 3, %v325
    %v327 = vrot.slane %v248, %v326
    %v328 = vlaneseq
    %v329 = vshrl.u32 %v328, 7
    %v330 = vsub.s32 3, %v329
    %v331 = vrot.slane %v144, %v330
    %v332 = vsel %vm322, %v327, %v331
    %v333 = vsel %vm323, %v327, %v331
    %v334 = vmul.f32 %v314, %v332
    %v335 = vmul.f32 %v315, %v333
    %v336 = vlaneseq
    %v337 = vshrl.u32 %v336, 7
    %v338 = vsub.s32 4, %v337
    %v339 = vrot.slane %v248, %v338
    %v340 = vlaneseq
    %v341 = vshrl.u32 %v340, 7
    %v342 = vsub.s32 4, %v341
    %v343 = vrot.slane %v144, %v342
    %v344 = vsel %vm260, %v339, %v343
    %v345 = vsel %vm261, %v339, %v343
    %v346 = vlaneseq
    %v347 = vshrl.u32 %v346, 7
    %v348 = vsub.s32 5, %v347
    %v349 = vrot.slane %v248, %v348
    %v350 = vlaneseq
    %v351 = vshrl.u32 %v350, 7
    %v352 = vsub.s32 5, %v351
    %v353 = vrot.slane %v144, %v352
    %v354 = vsel %vm280, %v349, %v353
    %v355 = vsel %vm281, %v349, %v353
    %v356 = vmul.f32 %v344, %v354
    %v357 = vmul.f32 %v345, %v355
    %v358 = vlaneseq
    %v359 = vshrl.u32 %v358, 7
    %v360 = vsub.s32 6, %v359
    %v361 = vrot.slane %v248, %v360
    %v362 = vlaneseq
    %v363 = vshrl.u32 %v362, 7
    %v364 = vsub.s32 6, %v363
    %v365 = vrot.slane %v144, %v364
    %v366 = vsel %vm302, %v361, %v365
    %v367 = vsel %vm303, %v361, %v365
    %v368 = vmul.f32 %v356, %v366
    %v369 = vmul.f32 %v357, %v367
    %v370 = vlaneseq
    %v371 = vshrl.u32 %v370, 7
    %v372 = vsub.s32 7, %v371
    %v373 = vrot.slane %v248, %v372
    %v374 = vlaneseq
    %v375 = vshrl.u32 %v374, 7
    %v376 = vsub.s32 7, %v375
    %v377 = vrot.slane %v144, %v376
    %v378 = vsel %vm322, %v373, %v377
    %v379 = vsel %vm323, %v373, %v377
    %v380 = vmul.f32 %v368, %v378
    %v381 = vmul.f32 %v369, %v379
    %v382 = vld [vmem:[#allocation5] sm:$0xff]
    %v383 = vld [vmem:[#allocation5 + $0x8] sm:$0xff]
    %v384 = vld [vmem:[#allocation5 + $0x10] sm:$0xff]
    %v385 = vld [vmem:[#allocation5 + $0x18] sm:$0xff]
    %vm386 = vcmask 261120
    %v388 = vsel %vm386, %v382, 0
    %v391 = vsel %vm386, %v383, 0
    %v394 = vsel %vm386, %v384, 0
    %v397 = vsel %vm386, %v385, 0
    %399 = vmatprep.subr.mxu0 0.0
    %400 = vmatpush1.msra.mxu0 0.0
    %401 = vmatprep.subr.mxu0 0.0
    %402 = vmatpush1.msra.mxu0 0.0
    %403 = vmatprep.subr.mxu0 0.0
    %404 = vmatpush1.msra.mxu0 0.0
    %405 = vmatprep.subr.mxu0 0.0
    %406 = vmatpush1.msra.mxu0 0.0
    %407 = vmatprep.subr.mxu0 0.0
    %408 = vmatpush1.msra.mxu0 0.0
    %409 = vmatprep.subr.mxu0 0.0
    %410 = vmatpush1.msra.mxu0 0.0
    %411 = vmatprep.subr.mxu0 0.0
    %412 = vmatpush1.msra.mxu0 0.0
    %413 = vmatprep.subr.mxu0 0.0
    %414 = vmatpush1.msra.mxu0 0.0
    %415 = vmatprep.subr.mxu0 0.0
    %416 = vmatpush1.msra.mxu0 0.0
    %417 = vmatprep.subr.mxu0 0.0
    %418 = vmatpush1.msra.mxu0 0.0
    %419 = vmatprep.subr.mxu0 0.0
    %420 = vmatpush1.msra.mxu0 0.0
    %421 = vmatprep.subr.mxu0 0.0
    %422 = vmatpush1.msra.mxu0 0.0
    %423 = vmatprep.subr.mxu0 0.0
    %424 = vmatpush1.msra.mxu0 %v381
    %425 = vmatprep.subr.mxu0 0.0
    %426 = vmatpush1.msra.mxu0 %v380
    %427 = vmatprep.subr.mxu0 0.0
    %428 = vmatpush1.msra.mxu0 %v335
    %429 = vmatprep.subr.mxu0 0.0
    %430 = vmatpush1.msra.mxu0 %v334
    %431 = vmatprep.subr.mxu0 0.0
    %432 = vmatpush2.msra.mxu0 0.0
    %433 = vmatprep.subr.mxu0 0.0
    %434 = vmatpush2.msra.mxu0 0.0
    %435 = vmatprep.subr.mxu0 0.0
    %436 = vmatpush2.msra.mxu0 0.0
    %437 = vmatprep.subr.mxu0 0.0
    %438 = vmatpush2.msra.mxu0 0.0
    %439 = vmatprep.subr.mxu0 0.0
    %440 = vmatpush2.msra.mxu0 0.0
    %441 = vmatprep.subr.mxu0 0.0
    %442 = vmatpush2.msra.mxu0 0.0
    %443 = vmatprep.subr.mxu0 0.0
    %444 = vmatpush2.msra.mxu0 0.0
    %445 = vmatprep.subr.mxu0 0.0
    %446 = vmatpush2.msra.mxu0 0.0
    %447 = vmatprep.subr.mxu0 0.0
    %448 = vmatpush2.msra.mxu0 0.0
    %449 = vmatprep.subr.mxu0 0.0
    %450 = vmatpush2.msra.mxu0 0.0
    %451 = vmatprep.subr.mxu0 0.0
    %452 = vmatpush2.msra.mxu0 0.0
    %453 = vmatprep.subr.mxu0 0.0
    %454 = vmatpush2.msra.mxu0 0.0
    %455 = vmatprep.subr.mxu0 0.0
    %456 = vmatpush2.msra.mxu0 0.0
    %457 = vmatprep.subr.mxu0 0.0
    %458 = vmatpush2.msra.mxu0 0.0
    %459 = vmatprep.subr.mxu0 0.0
    %460 = vmatpush2.msra.mxu0 0.0
    %461 = vmatprep.subr.mxu0 0.0
    %462 = vmatpush2.msra.mxu0 0.0
    %463 = vmatprep.mubr.f32.mxu0 0.0
    %464 = vmatmul.mubr.f32.gmra.mxu0 %v388
    %v465 = vpop.f32.mrf.mxu0
    %v466 = vadd.f32 0.0, %v465
    %v467 = vpop.f32.mrf.mxu0
    %468 = vmatprep.mubr.f32.mxu0 0.0
    %469 = vmatmul.mubr.f32.gmra.mxu0 %v391
    %v470 = vpop.f32.mrf.mxu0
    %v471 = vadd.f32 0.0, %v470
    %v472 = vpop.f32.mrf.mxu0
    %473 = vmatprep.mubr.f32.mxu0 0.0
    %474 = vmatmul.mubr.f32.gmra.mxu0 %v394
    %v475 = vpop.f32.mrf.mxu0
    %v476 = vadd.f32 0.0, %v475
    %v477 = vpop.f32.mrf.mxu0
    %478 = vmatprep.mubr.f32.mxu0 0.0
    %479 = vmatmul.mubr.f32.gmra.mxu0 %v397
    %v480 = vpop.f32.mrf.mxu0
    %v481 = vadd.f32 0.0, %v480
    %v482 = vpop.f32.mrf.mxu0
    %483 = vdwg.mxu0
    %v484 = vmul.f32 %v334, %v466
    %v485 = vmul.f32 %v335, %v471
    %v486 = vmul.f32 %v380, %v476
    %v487 = vmul.f32 %v381, %v481
    %v488 = vadd.f32 %v484, %v485
    %v489 = vrot.slane %v488, 4
    %v490 = vadd.f32 %v488, %v489
    %v491 = vrot.slane %v490, 2
    %v492 = vadd.f32 %v490, %v491
    %v493 = vrot.slane %v492, 1
    %v494 = vadd.f32 %v492, %v493
    %495 = vst [vmem:[#allocation7] sm:$0x1] %v494
    %v496 = vadd.f32 %v486, %v487
    %v497 = vrot.slane %v496, 4
    %v498 = vadd.f32 %v496, %v497
    %v499 = vrot.slane %v498, 2
    %v500 = vadd.f32 %v498, %v499
    %v501 = vrot.slane %v500, 1
    %v502 = vadd.f32 %v500, %v501
    %503 = vst [vmem:[#allocation7 + $0x1] sm:$0x1] %v502
    // Predicated region
    $region18: #{tpu_custom_call.1} parent=1 // pred_check
      _
    $region19: #{tpu_custom_call.1} parent=1 // pred_check_branch
      %505 = sbr.rel (0) target = $region21
    $region20: #{tpu_custom_call.1} parent=1 // pred_region
      %s507 = ssub.s32 32, 32
      %508 = vsyncadd [#allocation4], %s507
      %s510 = sshll.u32 [#allocation7], 4
      %s511 = int_to_ptr.vmem [resolvable:$true] %s510
      %513 = dma.vmem_to_hbm [thread:$0]  %s511, 32, %s2, [#allocation4]
    $region21: #{tpu_custom_call.1} parent=1 // pred_fallthru
      _
    // Predicated region
    $region22: #{tpu_custom_call.1} parent=1 // pred_check
      _
    $region23: #{tpu_custom_call.1} parent=1 // pred_check_branch
      %515 = sbr.rel (0) target = $region25
    $region24: #{tpu_custom_call.1} parent=1 // pred_region
      %516 = dma.done [#allocation4], 32
    $region25: #{tpu_custom_call.1} parent=1 // pred_fallthru
      _
    %517 = vsyncpa [#allocation3], 1
    %518 = vsyncpa [#allocation6], 1
    %519 = vsyncpa [#allocation4], 1

</llo_original>
